<compile_context>
chip_gen: v5e
topology: v5e:2x2
jax: 0.10.0
libtpu: 0.0.40
codegen_flags: <defaults>
</compile_context>

<pallas_src>
import math
import functools

import jax
import jax.numpy as jnp
from jax import lax
from jax.experimental import pallas as pl
from jax.experimental.pallas import tpu as pltpu

NEG_SLOPE = 0.2                  # FusedLeakyReLU negative slope
FUSED_SCALE = math.sqrt(2.0)     # FusedLeakyReLU output scale


def _res_block_kernel(x_ref, yy_ref, xx_ref,
                      w1_ref, b1_ref, w2_ref, b2_ref, w3_ref, b3_ref,
                      o_ref, *, H, W, K):
    """One batch-tile of NormalResBlock.

    x_ref : (Cin,  N) f32, N = batch_tile*H*W (batch folded into lanes)
    yy/xx : (1,    N) i32 per-lane spatial row / col index (repeats per sample)
    w1    : (Cout, K*K*Cin)  bf16  taps-major, EqualConv2d scale folded in
    w2    : (Cout, K*K*Cout) bf16
    w3    : (Cout, Cin)      bf16  (1x1 skip conv)
    b*    : (Cout, 1) f32          FusedLeakyReLU biases
    o_ref : (Cout, N) f32
    """
    N = x_ref.shape[1]
    pad = K // 2
    yy = yy_ref[...]
    xx = xx_ref[...]

    def im2col(a):
        """(C, N) f32 -> (K*K*C, N) bf16 of shifted + zero-masked copies."""
        pieces = []
        for ky in range(K):
            dy = ky - pad
            for kx in range(K):
                dx = kx - pad
                off = dy * W + dx
                # out[:, q] = a[:, q + off]  (circular; boundaries masked below)
                s = a if off == 0 else pltpu.roll(a, (-off) % N, 1)
                conds = []
                if dy < 0:
                    conds.append(yy >= -dy)
                if dy > 0:
                    conds.append(yy < H - dy)
                if dx < 0:
                    conds.append(xx >= -dx)
                if dx > 0:
                    conds.append(xx < W - dx)
                if conds:
                    m = functools.reduce(jnp.logical_and, conds)
                    s = jnp.where(m, s, 0.0)
                pieces.append(s)
        return jnp.concatenate(pieces, axis=0).astype(jnp.bfloat16)

    def equal_conv_lrelu(cols_bf16, w_ref, b_ref):
        acc = jnp.dot(w_ref[...], cols_bf16, preferred_element_type=jnp.float32)
        acc = acc + b_ref[...]
        return jnp.where(acc >= 0.0, acc, NEG_SLOPE * acc) * FUSED_SCALE

    x = x_ref[...]
    h1 = equal_conv_lrelu(im2col(x), w1_ref, b1_ref)               # conv1 3x3
    h2 = equal_conv_lrelu(im2col(h1), w2_ref, b2_ref)              # conv2 3x3
    sk = equal_conv_lrelu(x.astype(jnp.bfloat16), w3_ref, b3_ref)  # skip 1x1
    # act_layer='none' -> identity activation at the end.
    o_ref[...] = (h2 + sk) * (1.0 / FUSED_SCALE)


def init_params(key, in_channel, out_channel, kernel_size=3):
    """Parameters mirroring NormalResBlock.__init__ (lr_mul=1, bias=True).

    FusedLeakyReLU biases are zero-initialized in PyTorch; small random values
    are used here so the bias path of the kernel is actually exercised.
    """
    k1, k2, k3, k4, k5, k6 = jax.random.split(key, 6)
    w1 = jax.random.normal(
        k1, (out_channel, in_channel, kernel_size, kernel_size), jnp.float32)
    w2 = jax.random.normal(
        k2, (out_channel, out_channel, kernel_size, kernel_size), jnp.float32)
    w3 = jax.random.normal(k3, (out_channel, in_channel, 1, 1), jnp.float32)
    b1 = 0.1 * jax.random.normal(k4, (out_channel,), jnp.float32)
    b2 = 0.1 * jax.random.normal(k5, (out_channel,), jnp.float32)
    b3 = 0.1 * jax.random.normal(k6, (out_channel,), jnp.float32)
    return dict(w1=w1, w2=w2, w3=w3, b1=b1, b2=b2, b3=b3)


def normal_res_block(x, params, *, batch_tile=None):
    B, Cin, H, W = x.shape
    Cout, _, K, _ = params["w1"].shape
    assert K % 2 == 1, "only odd kernel_size ('same' padding K//2) supported"
    HW = H * W
    N = B * HW

    # Batch tiling: fold samples into the lane dimension; only split the batch
    # across grid steps when the per-sample map is 128-lane aligned.
    if batch_tile is None:
        batch_tile = B
        if B > 1 and HW % 128 == 0:
            target = max(1, 4096 // HW)          # ~4096 lanes per grid step
            for bt in range(1, B + 1):
                if B % bt == 0 and bt <= target:
                    batch_tile = bt
    assert B % batch_tile == 0
    nb = B // batch_tile
    Nt = batch_tile * HW

    # Fold EqualConv2d scales into the weights; taps-major (ky,kx,ci) layout so
    # each conv is a single (Cout, K*K*C) x (K*K*C, Nt) bf16 matmul.
    s1 = 1.0 / math.sqrt(Cin * K * K)
    s2 = 1.0 / math.sqrt(Cout * K * K)
    s3 = 1.0 / math.sqrt(Cin)
    w1r = jnp.transpose(s1 * params["w1"], (0, 2, 3, 1)).reshape(Cout, K * K * Cin)
    w2r = jnp.transpose(s2 * params["w2"], (0, 2, 3, 1)).reshape(Cout, K * K * Cout)
    w3r = (s3 * params["w3"]).reshape(Cout, Cin)
    w1r = w1r.astype(jnp.bfloat16)
    w2r = w2r.astype(jnp.bfloat16)
    w3r = w3r.astype(jnp.bfloat16)
    b1 = params["b1"].reshape(Cout, 1)
    b2 = params["b2"].reshape(Cout, 1)
    b3 = params["b3"].reshape(Cout, 1)

    # Lane-dense channel-major activations (Cin, B*H*W) plus per-lane spatial
    # coordinates for the conv boundary masks (pattern repeats per sample).
    xcm = jnp.transpose(x, (1, 0, 2, 3)).reshape(Cin, N)
    sp = jnp.arange(HW, dtype=jnp.int32)
    yy = jnp.tile(sp // W, (B,)).reshape(1, N)
    xx = jnp.tile(sp % W, (B,)).reshape(1, N)

    kernel = functools.partial(_res_block_kernel, H=H, W=W, K=K)

    def rep(shape):   # weights / biases: same (whole-array) block every step
        return pl.BlockSpec(shape, lambda i, _s=shape: (0,) * len(_s))

    out_flat = pl.pallas_call(
        kernel,
        out_shape=jax.ShapeDtypeStruct((Cout, N), jnp.float32),
        grid=(nb,),
        in_specs=[
            pl.BlockSpec((Cin, Nt), lambda i: (0, i)),
            pl.BlockSpec((1, Nt), lambda i: (0, i)),
            pl.BlockSpec((1, Nt), lambda i: (0, i)),
            rep((Cout, K * K * Cin)),
            rep((Cout, 1)),
            rep((Cout, K * K * Cout)),
            rep((Cout, 1)),
            rep((Cout, Cin)),
            rep((Cout, 1)),
        ],
        out_specs=pl.BlockSpec((Cout, Nt), lambda i: (0, i)),
        compiler_params=pltpu.CompilerParams(
            dimension_semantics=("parallel",)),
    )(xcm, yy, xx, w1r, b1, w2r, b2, w3r, b3)

    return jnp.transpose(out_flat.reshape(Cout, B, H, W), (1, 0, 2, 3))


def ref_forward(x, params):
    """Pure-JAX f32 reference matching the PyTorch forward semantics."""
    dn = ('NCHW', 'OIHW', 'NCHW')

    def conv_lrelu(inp, w, b):
        cin, k = w.shape[1], w.shape[-1]
        scale = 1.0 / math.sqrt(cin * k * k)
        p = k // 2
        out = lax.conv_general_dilated(inp, w * scale, (1, 1),
                                       [(p, p), (p, p)], dimension_numbers=dn)
        out = out + b[None, :, None, None]
        return jnp.where(out >= 0.0, out, NEG_SLOPE * out) * FUSED_SCALE

    h1 = conv_lrelu(x, params["w1"], params["b1"])
    h2 = conv_lrelu(h1, params["w2"], params["b2"])
    sk = conv_lrelu(x, params["w3"], params["b3"])
    return (h2 + sk) / math.sqrt(2.0)


if __name__ == "__main__":
    B, Cin, Cout, K, H, W = 2, 4, 8, 3, 16, 16
    key = jax.random.PRNGKey(0)
    kx, kp = jax.random.split(key)
    x = jax.random.normal(kx, (B, Cin, H, W), jnp.float32)
    params = init_params(kp, Cin, Cout, K)

    out = jax.block_until_ready(normal_res_block(x, params))

    ref = ref_forward(x, params)
    err = float(jnp.max(jnp.abs(out - ref)))
    tol = 3e-2 * (1.0 + float(jnp.max(jnp.abs(ref))))   # bf16 MXU operands
    assert out.shape == (B, Cout, H, W), out.shape
    assert err < tol, f"max abs err {err} exceeds tol {tol}"
    print("KERNEL_OK")
</pallas_src>

<mosaic_0001>
module attributes {stable_mosaic.version = 11 : i64} {
  func.func @_res_block_kernel(%arg0: i32, %arg1: memref<4x512xf32, #tpu.memory_space<vmem>>, %arg2: memref<1x512xi32, #tpu.memory_space<vmem>>, %arg3: memref<1x512xi32, #tpu.memory_space<vmem>>, %arg4: memref<8x36xbf16, #tpu.memory_space<vmem>>, %arg5: memref<8x1xf32, #tpu.memory_space<vmem>>, %arg6: memref<8x72xbf16, #tpu.memory_space<vmem>>, %arg7: memref<8x1xf32, #tpu.memory_space<vmem>>, %arg8: memref<8x4xbf16, #tpu.memory_space<vmem>>, %arg9: memref<8x1xf32, #tpu.memory_space<vmem>>, %arg10: memref<8x512xf32, #tpu.memory_space<vmem>>) attributes {dimension_semantics = [#tpu.dimension_semantics<parallel>], iteration_bounds = array<i64: 1>, scalar_prefetch = 0 : i64, scratch_operands = 0 : i64, tpu.core_type = #tpu.core_type<tc>, window_params = [{transform_indices = @transform_0, window_bounds = array<i64: 4, 512>}, {transform_indices = @transform_1, window_bounds = array<i64: 1, 512>}, {transform_indices = @transform_2, window_bounds = array<i64: 1, 512>}, {pipeline_mode = #tpu.pipeline_mode<synchronous>, transform_indices = @transform_3, window_bounds = array<i64: 8, 36>}, {pipeline_mode = #tpu.pipeline_mode<synchronous>, transform_indices = @transform_4, window_bounds = array<i64: 8, 1>}, {pipeline_mode = #tpu.pipeline_mode<synchronous>, transform_indices = @transform_5, window_bounds = array<i64: 8, 72>}, {pipeline_mode = #tpu.pipeline_mode<synchronous>, transform_indices = @transform_6, window_bounds = array<i64: 8, 1>}, {pipeline_mode = #tpu.pipeline_mode<synchronous>, transform_indices = @transform_7, window_bounds = array<i64: 8, 4>}, {pipeline_mode = #tpu.pipeline_mode<synchronous>, transform_indices = @transform_8, window_bounds = array<i64: 8, 1>}, {transform_indices = @transform_9, window_bounds = array<i64: 8, 512>}]} {
    %c0 = arith.constant 0 : index
    %c0_0 = arith.constant 0 : index
    %0 = vector.load %arg2[%c0, %c0_0] : memref<1x512xi32, #tpu.memory_space<vmem>>, vector<1x512xi32>
    %c0_1 = arith.constant 0 : index
    %c0_2 = arith.constant 0 : index
    %1 = vector.load %arg3[%c0_1, %c0_2] : memref<1x512xi32, #tpu.memory_space<vmem>>, vector<1x512xi32>
    %c0_3 = arith.constant 0 : index
    %c0_4 = arith.constant 0 : index
    %2 = vector.load %arg1[%c0_3, %c0_4] : memref<4x512xf32, #tpu.memory_space<vmem>>, vector<4x512xf32>
    %c17_i32 = arith.constant 17 : i32
    %3 = tpu.dynamic_rotate %2 by %c17_i32 dim 1 : vector<4x512xf32>, i32 -> vector<4x512xf32>
    %c1_i32 = arith.constant 1 : i32
    %4 = vector.broadcast %c1_i32 : i32 to vector<1x512xi32>
    %5 = arith.cmpi sge, %0, %4 : vector<1x512xi32>
    %c1_i32_5 = arith.constant 1 : i32
    %6 = vector.broadcast %c1_i32_5 : i32 to vector<1x512xi32>
    %7 = arith.cmpi sge, %1, %6 : vector<1x512xi32>
    %8 = arith.andi %5, %7 : vector<1x512xi1>
    %cst = arith.constant 0.000000e+00 : f32
    %9 = vector.shape_cast %8 : vector<1x512xi1> to vector<1x512xi1>
    %10 = vector.broadcast %9 : vector<1x512xi1> to vector<4x512xi1>
    %11 = vector.broadcast %cst : f32 to vector<4x512xf32>
    %12 = arith.select %10, %3, %11 : vector<4x512xi1>, vector<4x512xf32>
    %c16_i32 = arith.constant 16 : i32
    %13 = tpu.dynamic_rotate %2 by %c16_i32 dim 1 : vector<4x512xf32>, i32 -> vector<4x512xf32>
    %c1_i32_6 = arith.constant 1 : i32
    %14 = vector.broadcast %c1_i32_6 : i32 to vector<1x512xi32>
    %15 = arith.cmpi sge, %0, %14 : vector<1x512xi32>
    %cst_7 = arith.constant 0.000000e+00 : f32
    %16 = vector.shape_cast %15 : vector<1x512xi1> to vector<1x512xi1>
    %17 = vector.broadcast %16 : vector<1x512xi1> to vector<4x512xi1>
    %18 = vector.broadcast %cst_7 : f32 to vector<4x512xf32>
    %19 = arith.select %17, %13, %18 : vector<4x512xi1>, vector<4x512xf32>
    %c15_i32 = arith.constant 15 : i32
    %20 = tpu.dynamic_rotate %2 by %c15_i32 dim 1 : vector<4x512xf32>, i32 -> vector<4x512xf32>
    %c1_i32_8 = arith.constant 1 : i32
    %21 = vector.broadcast %c1_i32_8 : i32 to vector<1x512xi32>
    %22 = arith.cmpi sge, %0, %21 : vector<1x512xi32>
    %c15_i32_9 = arith.constant 15 : i32
    %23 = vector.broadcast %c15_i32_9 : i32 to vector<1x512xi32>
    %24 = arith.cmpi slt, %1, %23 : vector<1x512xi32>
    %25 = arith.andi %22, %24 : vector<1x512xi1>
    %cst_10 = arith.constant 0.000000e+00 : f32
    %26 = vector.shape_cast %25 : vector<1x512xi1> to vector<1x512xi1>
    %27 = vector.broadcast %26 : vector<1x512xi1> to vector<4x512xi1>
    %28 = vector.broadcast %cst_10 : f32 to vector<4x512xf32>
    %29 = arith.select %27, %20, %28 : vector<4x512xi1>, vector<4x512xf32>
    %c1_i32_11 = arith.constant 1 : i32
    %30 = tpu.dynamic_rotate %2 by %c1_i32_11 dim 1 : vector<4x512xf32>, i32 -> vector<4x512xf32>
    %c1_i32_12 = arith.constant 1 : i32
    %31 = vector.broadcast %c1_i32_12 : i32 to vector<1x512xi32>
    %32 = arith.cmpi sge, %1, %31 : vector<1x512xi32>
    %cst_13 = arith.constant 0.000000e+00 : f32
    %33 = vector.shape_cast %32 : vector<1x512xi1> to vector<1x512xi1>
    %34 = vector.broadcast %33 : vector<1x512xi1> to vector<4x512xi1>
    %35 = vector.broadcast %cst_13 : f32 to vector<4x512xf32>
    %36 = arith.select %34, %30, %35 : vector<4x512xi1>, vector<4x512xf32>
    %c511_i32 = arith.constant 511 : i32
    %37 = tpu.dynamic_rotate %2 by %c511_i32 dim 1 : vector<4x512xf32>, i32 -> vector<4x512xf32>
    %c15_i32_14 = arith.constant 15 : i32
    %38 = vector.broadcast %c15_i32_14 : i32 to vector<1x512xi32>
    %39 = arith.cmpi slt, %1, %38 : vector<1x512xi32>
    %cst_15 = arith.constant 0.000000e+00 : f32
    %40 = vector.shape_cast %39 : vector<1x512xi1> to vector<1x512xi1>
    %41 = vector.broadcast %40 : vector<1x512xi1> to vector<4x512xi1>
    %42 = vector.broadcast %cst_15 : f32 to vector<4x512xf32>
    %43 = arith.select %41, %37, %42 : vector<4x512xi1>, vector<4x512xf32>
    %c497_i32 = arith.constant 497 : i32
    %44 = tpu.dynamic_rotate %2 by %c497_i32 dim 1 : vector<4x512xf32>, i32 -> vector<4x512xf32>
    %c15_i32_16 = arith.constant 15 : i32
    %45 = vector.broadcast %c15_i32_16 : i32 to vector<1x512xi32>
    %46 = arith.cmpi slt, %0, %45 : vector<1x512xi32>
    %c1_i32_17 = arith.constant 1 : i32
    %47 = vector.broadcast %c1_i32_17 : i32 to vector<1x512xi32>
    %48 = arith.cmpi sge, %1, %47 : vector<1x512xi32>
    %49 = arith.andi %46, %48 : vector<1x512xi1>
    %cst_18 = arith.constant 0.000000e+00 : f32
    %50 = vector.shape_cast %49 : vector<1x512xi1> to vector<1x512xi1>
    %51 = vector.broadcast %50 : vector<1x512xi1> to vector<4x512xi1>
    %52 = vector.broadcast %cst_18 : f32 to vector<4x512xf32>
    %53 = arith.select %51, %44, %52 : vector<4x512xi1>, vector<4x512xf32>
    %c496_i32 = arith.constant 496 : i32
    %54 = tpu.dynamic_rotate %2 by %c496_i32 dim 1 : vector<4x512xf32>, i32 -> vector<4x512xf32>
    %c15_i32_19 = arith.constant 15 : i32
    %55 = vector.broadcast %c15_i32_19 : i32 to vector<1x512xi32>
    %56 = arith.cmpi slt, %0, %55 : vector<1x512xi32>
    %cst_20 = arith.constant 0.000000e+00 : f32
    %57 = vector.shape_cast %56 : vector<1x512xi1> to vector<1x512xi1>
    %58 = vector.broadcast %57 : vector<1x512xi1> to vector<4x512xi1>
    %59 = vector.broadcast %cst_20 : f32 to vector<4x512xf32>
    %60 = arith.select %58, %54, %59 : vector<4x512xi1>, vector<4x512xf32>
    %c495_i32 = arith.constant 495 : i32
    %61 = tpu.dynamic_rotate %2 by %c495_i32 dim 1 : vector<4x512xf32>, i32 -> vector<4x512xf32>
    %c15_i32_21 = arith.constant 15 : i32
    %62 = vector.broadcast %c15_i32_21 : i32 to vector<1x512xi32>
    %63 = arith.cmpi slt, %0, %62 : vector<1x512xi32>
    %c15_i32_22 = arith.constant 15 : i32
    %64 = vector.broadcast %c15_i32_22 : i32 to vector<1x512xi32>
    %65 = arith.cmpi slt, %1, %64 : vector<1x512xi32>
    %66 = arith.andi %63, %65 : vector<1x512xi1>
    %cst_23 = arith.constant 0.000000e+00 : f32
    %67 = vector.shape_cast %66 : vector<1x512xi1> to vector<1x512xi1>
    %68 = vector.broadcast %67 : vector<1x512xi1> to vector<4x512xi1>
    %69 = vector.broadcast %cst_23 : f32 to vector<4x512xf32>
    %70 = arith.select %68, %61, %69 : vector<4x512xi1>, vector<4x512xf32>
    %71 = tpu.concatenate %12, %19, %29, %36, %2, %43, %53, %60, %70 in 0 : vector<4x512xf32>, vector<4x512xf32>, vector<4x512xf32>, vector<4x512xf32>, vector<4x512xf32>, vector<4x512xf32>, vector<4x512xf32>, vector<4x512xf32>, vector<4x512xf32> -> vector<36x512xf32>
    %72 = arith.truncf %71 : vector<36x512xf32> to vector<36x512xbf16>
    %c0_24 = arith.constant 0 : index
    %c0_25 = arith.constant 0 : index
    %73 = vector.load %arg4[%c0_24, %c0_25] : memref<8x36xbf16, #tpu.memory_space<vmem>>, vector<8x36xbf16>
    %cst_26 = arith.constant dense<0.000000e+00> : vector<8x512xf32>
    %74 = tpu.matmul %73, %72, %cst_26 {dimension_numbers = #tpu.dot_dimension_numbers<[1], [0], [0], [1], [0, 0, 1, 1], [], []>} : vector<8x36xbf16>, vector<36x512xbf16>, vector<8x512xf32> -> vector<8x512xf32>
    %c0_27 = arith.constant 0 : index
    %c0_28 = arith.constant 0 : index
    %75 = vector.load %arg5[%c0_27, %c0_28] : memref<8x1xf32, #tpu.memory_space<vmem>>, vector<8x1xf32>
    %76 = vector.broadcast %75 : vector<8x1xf32> to vector<8x512xf32>
    %77 = arith.addf %74, %76 : vector<8x512xf32>
    %cst_29 = arith.constant 0.000000e+00 : f32
    %78 = vector.broadcast %cst_29 : f32 to vector<8x512xf32>
    %79 = arith.cmpf oge, %77, %78 : vector<8x512xf32>
    %cst_30 = arith.constant 2.000000e-01 : f32
    %80 = vector.broadcast %cst_30 : f32 to vector<8x512xf32>
    %81 = arith.mulf %80, %77 : vector<8x512xf32>
    %82 = arith.select %79, %77, %81 : vector<8x512xi1>, vector<8x512xf32>
    %cst_31 = arith.constant 1.41421354 : f32
    %83 = vector.broadcast %cst_31 : f32 to vector<8x512xf32>
    %84 = arith.mulf %82, %83 : vector<8x512xf32>
    %c17_i32_32 = arith.constant 17 : i32
    %85 = tpu.dynamic_rotate %84 by %c17_i32_32 dim 1 : vector<8x512xf32>, i32 -> vector<8x512xf32>
    %c1_i32_33 = arith.constant 1 : i32
    %86 = vector.broadcast %c1_i32_33 : i32 to vector<1x512xi32>
    %87 = arith.cmpi sge, %0, %86 : vector<1x512xi32>
    %c1_i32_34 = arith.constant 1 : i32
    %88 = vector.broadcast %c1_i32_34 : i32 to vector<1x512xi32>
    %89 = arith.cmpi sge, %1, %88 : vector<1x512xi32>
    %90 = arith.andi %87, %89 : vector<1x512xi1>
    %cst_35 = arith.constant 0.000000e+00 : f32
    %91 = vector.shape_cast %90 : vector<1x512xi1> to vector<1x512xi1>
    %92 = vector.broadcast %91 : vector<1x512xi1> to vector<8x512xi1>
    %93 = vector.broadcast %cst_35 : f32 to vector<8x512xf32>
    %94 = arith.select %92, %85, %93 : vector<8x512xi1>, vector<8x512xf32>
    %c16_i32_36 = arith.constant 16 : i32
    %95 = tpu.dynamic_rotate %84 by %c16_i32_36 dim 1 : vector<8x512xf32>, i32 -> vector<8x512xf32>
    %c1_i32_37 = arith.constant 1 : i32
    %96 = vector.broadcast %c1_i32_37 : i32 to vector<1x512xi32>
    %97 = arith.cmpi sge, %0, %96 : vector<1x512xi32>
    %cst_38 = arith.constant 0.000000e+00 : f32
    %98 = vector.shape_cast %97 : vector<1x512xi1> to vector<1x512xi1>
    %99 = vector.broadcast %98 : vector<1x512xi1> to vector<8x512xi1>
    %100 = vector.broadcast %cst_38 : f32 to vector<8x512xf32>
    %101 = arith.select %99, %95, %100 : vector<8x512xi1>, vector<8x512xf32>
    %c15_i32_39 = arith.constant 15 : i32
    %102 = tpu.dynamic_rotate %84 by %c15_i32_39 dim 1 : vector<8x512xf32>, i32 -> vector<8x512xf32>
    %c1_i32_40 = arith.constant 1 : i32
    %103 = vector.broadcast %c1_i32_40 : i32 to vector<1x512xi32>
    %104 = arith.cmpi sge, %0, %103 : vector<1x512xi32>
    %c15_i32_41 = arith.constant 15 : i32
    %105 = vector.broadcast %c15_i32_41 : i32 to vector<1x512xi32>
    %106 = arith.cmpi slt, %1, %105 : vector<1x512xi32>
    %107 = arith.andi %104, %106 : vector<1x512xi1>
    %cst_42 = arith.constant 0.000000e+00 : f32
    %108 = vector.shape_cast %107 : vector<1x512xi1> to vector<1x512xi1>
    %109 = vector.broadcast %108 : vector<1x512xi1> to vector<8x512xi1>
    %110 = vector.broadcast %cst_42 : f32 to vector<8x512xf32>
    %111 = arith.select %109, %102, %110 : vector<8x512xi1>, vector<8x512xf32>
    %c1_i32_43 = arith.constant 1 : i32
    %112 = tpu.dynamic_rotate %84 by %c1_i32_43 dim 1 : vector<8x512xf32>, i32 -> vector<8x512xf32>
    %c1_i32_44 = arith.constant 1 : i32
    %113 = vector.broadcast %c1_i32_44 : i32 to vector<1x512xi32>
    %114 = arith.cmpi sge, %1, %113 : vector<1x512xi32>
    %cst_45 = arith.constant 0.000000e+00 : f32
    %115 = vector.shape_cast %114 : vector<1x512xi1> to vector<1x512xi1>
    %116 = vector.broadcast %115 : vector<1x512xi1> to vector<8x512xi1>
    %117 = vector.broadcast %cst_45 : f32 to vector<8x512xf32>
    %118 = arith.select %116, %112, %117 : vector<8x512xi1>, vector<8x512xf32>
    %c511_i32_46 = arith.constant 511 : i32
    %119 = tpu.dynamic_rotate %84 by %c511_i32_46 dim 1 : vector<8x512xf32>, i32 -> vector<8x512xf32>
    %c15_i32_47 = arith.constant 15 : i32
    %120 = vector.broadcast %c15_i32_47 : i32 to vector<1x512xi32>
    %121 = arith.cmpi slt, %1, %120 : vector<1x512xi32>
    %cst_48 = arith.constant 0.000000e+00 : f32
    %122 = vector.shape_cast %121 : vector<1x512xi1> to vector<1x512xi1>
    %123 = vector.broadcast %122 : vector<1x512xi1> to vector<8x512xi1>
    %124 = vector.broadcast %cst_48 : f32 to vector<8x512xf32>
    %125 = arith.select %123, %119, %124 : vector<8x512xi1>, vector<8x512xf32>
    %c497_i32_49 = arith.constant 497 : i32
    %126 = tpu.dynamic_rotate %84 by %c497_i32_49 dim 1 : vector<8x512xf32>, i32 -> vector<8x512xf32>
    %c15_i32_50 = arith.constant 15 : i32
    %127 = vector.broadcast %c15_i32_50 : i32 to vector<1x512xi32>
    %128 = arith.cmpi slt, %0, %127 : vector<1x512xi32>
    %c1_i32_51 = arith.constant 1 : i32
    %129 = vector.broadcast %c1_i32_51 : i32 to vector<1x512xi32>
    %130 = arith.cmpi sge, %1, %129 : vector<1x512xi32>
    %131 = arith.andi %128, %130 : vector<1x512xi1>
    %cst_52 = arith.constant 0.000000e+00 : f32
    %132 = vector.shape_cast %131 : vector<1x512xi1> to vector<1x512xi1>
    %133 = vector.broadcast %132 : vector<1x512xi1> to vector<8x512xi1>
    %134 = vector.broadcast %cst_52 : f32 to vector<8x512xf32>
    %135 = arith.select %133, %126, %134 : vector<8x512xi1>, vector<8x512xf32>
    %c496_i32_53 = arith.constant 496 : i32
    %136 = tpu.dynamic_rotate %84 by %c496_i32_53 dim 1 : vector<8x512xf32>, i32 -> vector<8x512xf32>
    %c15_i32_54 = arith.constant 15 : i32
    %137 = vector.broadcast %c15_i32_54 : i32 to vector<1x512xi32>
    %138 = arith.cmpi slt, %0, %137 : vector<1x512xi32>
    %cst_55 = arith.constant 0.000000e+00 : f32
    %139 = vector.shape_cast %138 : vector<1x512xi1> to vector<1x512xi1>
    %140 = vector.broadcast %139 : vector<1x512xi1> to vector<8x512xi1>
    %141 = vector.broadcast %cst_55 : f32 to vector<8x512xf32>
    %142 = arith.select %140, %136, %141 : vector<8x512xi1>, vector<8x512xf32>
    %c495_i32_56 = arith.constant 495 : i32
    %143 = tpu.dynamic_rotate %84 by %c495_i32_56 dim 1 : vector<8x512xf32>, i32 -> vector<8x512xf32>
    %c15_i32_57 = arith.constant 15 : i32
    %144 = vector.broadcast %c15_i32_57 : i32 to vector<1x512xi32>
    %145 = arith.cmpi slt, %0, %144 : vector<1x512xi32>
    %c15_i32_58 = arith.constant 15 : i32
    %146 = vector.broadcast %c15_i32_58 : i32 to vector<1x512xi32>
    %147 = arith.cmpi slt, %1, %146 : vector<1x512xi32>
    %148 = arith.andi %145, %147 : vector<1x512xi1>
    %cst_59 = arith.constant 0.000000e+00 : f32
    %149 = vector.shape_cast %148 : vector<1x512xi1> to vector<1x512xi1>
    %150 = vector.broadcast %149 : vector<1x512xi1> to vector<8x512xi1>
    %151 = vector.broadcast %cst_59 : f32 to vector<8x512xf32>
    %152 = arith.select %150, %143, %151 : vector<8x512xi1>, vector<8x512xf32>
    %153 = tpu.concatenate %94, %101, %111, %118, %84, %125, %135, %142, %152 in 0 : vector<8x512xf32>, vector<8x512xf32>, vector<8x512xf32>, vector<8x512xf32>, vector<8x512xf32>, vector<8x512xf32>, vector<8x512xf32>, vector<8x512xf32>, vector<8x512xf32> -> vector<72x512xf32>
    %154 = arith.truncf %153 : vector<72x512xf32> to vector<72x512xbf16>
    %c0_60 = arith.constant 0 : index
    %c0_61 = arith.constant 0 : index
    %155 = vector.load %arg6[%c0_60, %c0_61] : memref<8x72xbf16, #tpu.memory_space<vmem>>, vector<8x72xbf16>
    %cst_62 = arith.constant dense<0.000000e+00> : vector<8x512xf32>
    %156 = tpu.matmul %155, %154, %cst_62 {dimension_numbers = #tpu.dot_dimension_numbers<[1], [0], [0], [1], [0, 0, 1, 1], [], []>} : vector<8x72xbf16>, vector<72x512xbf16>, vector<8x512xf32> -> vector<8x512xf32>
    %c0_63 = arith.constant 0 : index
    %c0_64 = arith.constant 0 : index
    %157 = vector.load %arg7[%c0_63, %c0_64] : memref<8x1xf32, #tpu.memory_space<vmem>>, vector<8x1xf32>
    %158 = vector.broadcast %157 : vector<8x1xf32> to vector<8x512xf32>
    %159 = arith.addf %156, %158 : vector<8x512xf32>
    %cst_65 = arith.constant 0.000000e+00 : f32
    %160 = vector.broadcast %cst_65 : f32 to vector<8x512xf32>
    %161 = arith.cmpf oge, %159, %160 : vector<8x512xf32>
    %cst_66 = arith.constant 2.000000e-01 : f32
    %162 = vector.broadcast %cst_66 : f32 to vector<8x512xf32>
    %163 = arith.mulf %162, %159 : vector<8x512xf32>
    %164 = arith.select %161, %159, %163 : vector<8x512xi1>, vector<8x512xf32>
    %cst_67 = arith.constant 1.41421354 : f32
    %165 = vector.broadcast %cst_67 : f32 to vector<8x512xf32>
    %166 = arith.mulf %164, %165 : vector<8x512xf32>
    %167 = arith.truncf %2 : vector<4x512xf32> to vector<4x512xbf16>
    %c0_68 = arith.constant 0 : index
    %c0_69 = arith.constant 0 : index
    %168 = vector.load %arg8[%c0_68, %c0_69] : memref<8x4xbf16, #tpu.memory_space<vmem>>, vector<8x4xbf16>
    %cst_70 = arith.constant dense<0.000000e+00> : vector<8x512xf32>
    %169 = tpu.matmul %168, %167, %cst_70 {dimension_numbers = #tpu.dot_dimension_numbers<[1], [0], [0], [1], [0, 0, 1, 1], [], []>} : vector<8x4xbf16>, vector<4x512xbf16>, vector<8x512xf32> -> vector<8x512xf32>
    %c0_71 = arith.constant 0 : index
    %c0_72 = arith.constant 0 : index
    %170 = vector.load %arg9[%c0_71, %c0_72] : memref<8x1xf32, #tpu.memory_space<vmem>>, vector<8x1xf32>
    %171 = vector.broadcast %170 : vector<8x1xf32> to vector<8x512xf32>
    %172 = arith.addf %169, %171 : vector<8x512xf32>
    %cst_73 = arith.constant 0.000000e+00 : f32
    %173 = vector.broadcast %cst_73 : f32 to vector<8x512xf32>
    %174 = arith.cmpf oge, %172, %173 : vector<8x512xf32>
    %cst_74 = arith.constant 2.000000e-01 : f32
    %175 = vector.broadcast %cst_74 : f32 to vector<8x512xf32>
    %176 = arith.mulf %175, %172 : vector<8x512xf32>
    %177 = arith.select %174, %172, %176 : vector<8x512xi1>, vector<8x512xf32>
    %cst_75 = arith.constant 1.41421354 : f32
    %178 = vector.broadcast %cst_75 : f32 to vector<8x512xf32>
    %179 = arith.mulf %177, %178 : vector<8x512xf32>
    %180 = arith.addf %166, %179 : vector<8x512xf32>
    %cst_76 = arith.constant 0.707106769 : f32
    %181 = vector.broadcast %cst_76 : f32 to vector<8x512xf32>
    %182 = arith.mulf %180, %181 : vector<8x512xf32>
    %c0_77 = arith.constant 0 : index
    %c0_78 = arith.constant 0 : index
    %183 = vector.load %arg10[%c0_77, %c0_78] : memref<8x512xf32, #tpu.memory_space<vmem>>, vector<8x512xf32>
    tpu.vector_store %arg10[%c0_77, %c0_78], %182 {strides = array<i32>} : memref<8x512xf32, #tpu.memory_space<vmem>>, vector<8x512xf32>,
    return
  }
  func.func @transform_0(%arg0: i32) -> (i32, i32) {
    %c0_i32 = arith.constant 0 : i32
    %c0_i32_0 = arith.constant 0 : i32
    return %c0_i32, %arg0 : i32, i32
  }
  func.func @transform_1(%arg0: i32) -> (i32, i32) {
    %c0_i32 = arith.constant 0 : i32
    %c0_i32_0 = arith.constant 0 : i32
    return %c0_i32, %arg0 : i32, i32
  }
  func.func @transform_2(%arg0: i32) -> (i32, i32) {
    %c0_i32 = arith.constant 0 : i32
    %c0_i32_0 = arith.constant 0 : i32
    return %c0_i32, %arg0 : i32, i32
  }
  func.func @transform_3(%arg0: i32) -> (i32, i32) {
    %c0_i32 = arith.constant 0 : i32
    %c0_i32_0 = arith.constant 0 : i32
    %c0_i32_1 = arith.constant 0 : i32
    return %c0_i32, %c0_i32_0 : i32, i32
  }
  func.func @transform_4(%arg0: i32) -> (i32, i32) {
    %c0_i32 = arith.constant 0 : i32
    %c0_i32_0 = arith.constant 0 : i32
    %c0_i32_1 = arith.constant 0 : i32
    return %c0_i32, %c0_i32_0 : i32, i32
  }
  func.func @transform_5(%arg0: i32) -> (i32, i32) {
    %c0_i32 = arith.constant 0 : i32
    %c0_i32_0 = arith.constant 0 : i32
    %c0_i32_1 = arith.constant 0 : i32
    return %c0_i32, %c0_i32_0 : i32, i32
  }
  func.func @transform_6(%arg0: i32) -> (i32, i32) {
    %c0_i32 = arith.constant 0 : i32
    %c0_i32_0 = arith.constant 0 : i32
    %c0_i32_1 = arith.constant 0 : i32
    return %c0_i32, %c0_i32_0 : i32, i32
  }
  func.func @transform_7(%arg0: i32) -> (i32, i32) {
    %c0_i32 = arith.constant 0 : i32
    %c0_i32_0 = arith.constant 0 : i32
    %c0_i32_1 = arith.constant 0 : i32
    return %c0_i32, %c0_i32_0 : i32, i32
  }
  func.func @transform_8(%arg0: i32) -> (i32, i32) {
    %c0_i32 = arith.constant 0 : i32
    %c0_i32_0 = arith.constant 0 : i32
    %c0_i32_1 = arith.constant 0 : i32
    return %c0_i32, %c0_i32_0 : i32, i32
  }
  func.func @transform_9(%arg0: i32) -> (i32, i32) {
    %c0_i32 = arith.constant 0 : i32
    %c0_i32_0 = arith.constant 0 : i32
    return %c0_i32, %arg0 : i32, i32
  }
}

</mosaic_0001>

<llo_original>
// kernel: tpu_custom_call.1
$region0: #{tpu_custom_call.1}
  #allocation0 [shape = 'u32[]', space=smem, size = 0x4, offset = 0x4, fixed_abs, tag = 'smem constant byte address 0x4 - core index']
  #allocation1 [shape = 'u32[72,128]{1,0:T(1,128)}', space=vmem, size = 0x9000, scoped, tag = 'internal scratch']
  %s0 = inlined_call_operand.vmem [shape: f32[4,512], index: 0, kind: input, shape index: {}]
  %s1 = inlined_call_operand.vmem [shape: s32[1,512], index: 1, kind: input, shape index: {}]
  %s2 = inlined_call_operand.vmem [shape: s32[1,512], index: 2, kind: input, shape index: {}]
  %s3 = inlined_call_operand.vmem [shape: bf16[8,36], index: 3, kind: input, shape index: {}]
  %s4 = inlined_call_operand.vmem [shape: f32[8,1], index: 4, kind: input, shape index: {}]
  %s5 = inlined_call_operand.hbm [shape: bf16[8,72], index: 5, kind: input, shape index: {}]
  %s6 = inlined_call_operand.vmem [shape: f32[8,1], index: 6, kind: input, shape index: {}]
  %s7 = inlined_call_operand.vmem [shape: bf16[8,4], index: 7, kind: input, shape index: {}]
  %s8 = inlined_call_operand.vmem [shape: f32[8,1], index: 8, kind: input, shape index: {}]
  %s9 = inlined_call_operand.hbm [shape: f32[8,512], index: 9, kind: output, shape index: {}]
  %s10 = sld [smem:[#allocation0]]
  $region50: #{tpu_custom_call.1} parent=0
    _
  %s12 = ssub.s32 1, %s10
  %s13 = scalar_select 0, %s12, %s10
  $region1: #{tpu_custom_call.1} parent=0
    #allocation2 [shape = 'u8[2048]{0}', space=vmem, size = 0x800, scoped, tag = 'input window, operand 5, single buffered']
    #allocation3 [shape = 's32[1]{0}', space=sflag, size = 0x4, scoped, tag = 'scoped memory for tpu_custom_call.1']
    #allocation4 [shape = 's32[1]{0}', space=sflag, size = 0x4, scoped, tag = 'scoped memory for tpu_custom_call.1']
    #allocation5 [shape = 'u8[16384]{0}', space=vmem, size = 0x4000, scoped, tag = 'output window, operand 0, single buffered']
    %14 = vsyncpa [#allocation3], 0
    %15 = vsyncpa [#allocation4], 0
    // Predicated region
    $region2: #{tpu_custom_call.1} parent=1 // pred_check
      _
    $region3: #{tpu_custom_call.1} parent=1 // pred_check_branch
      %17 = sbr.rel (0) target = $region5
    $region4: #{tpu_custom_call.1} parent=1 // pred_region
      _
    $region5: #{tpu_custom_call.1} parent=1 // pred_fallthru
      _
    // Predicated region
    $region6: #{tpu_custom_call.1} parent=1 // pred_check
      _
    $region7: #{tpu_custom_call.1} parent=1 // pred_check_branch
      %19 = sbr.rel (0) target = $region9
    $region8: #{tpu_custom_call.1} parent=1 // pred_region
      _
    $region9: #{tpu_custom_call.1} parent=1 // pred_fallthru
      _
    // Predicated region
    $region10: #{tpu_custom_call.1} parent=1 // pred_check
      _
    $region11: #{tpu_custom_call.1} parent=1 // pred_check_branch
      %21 = sbr.rel (0) target = $region13
    $region12: #{tpu_custom_call.1} parent=1 // pred_region
      _
    $region13: #{tpu_custom_call.1} parent=1 // pred_fallthru
      _
    // Predicated region
    $region14: #{tpu_custom_call.1} parent=1 // pred_check
      _
    $region15: #{tpu_custom_call.1} parent=1 // pred_check_branch
      %23 = sbr.rel (0) target = $region17
    $region16: #{tpu_custom_call.1} parent=1 // pred_region
      _
    $region17: #{tpu_custom_call.1} parent=1 // pred_fallthru
      _
    // Predicated region
    $region18: #{tpu_custom_call.1} parent=1 // pred_check
      _
    $region19: #{tpu_custom_call.1} parent=1 // pred_check_branch
      %25 = sbr.rel (0) target = $region21
    $region20: #{tpu_custom_call.1} parent=1 // pred_region
      _
    $region21: #{tpu_custom_call.1} parent=1 // pred_fallthru
      _
    // Predicated region
    $region22: #{tpu_custom_call.1} parent=1 // pred_check
      _
    $region23: #{tpu_custom_call.1} parent=1 // pred_check_branch
      %27 = sbr.rel (0) target = $region25
    $region24: #{tpu_custom_call.1} parent=1 // pred_region
      %29 = vsyncadd [#allocation3], 0
      %s31 = sshll.u32 %s5, 4
      %s32 = int_to_ptr.hbm [resolvable:$true] %s31
      %s33 = sshll.u32 [#allocation2], 4
      %s34 = int_to_ptr.vmem [resolvable:$true] %s33
      %36 = dma.hbm_to_vmem [thread:$0]  %s32, 64, %s34, [#allocation3]
    $region25: #{tpu_custom_call.1} parent=1 // pred_fallthru
      _
    // Predicated region
    $region26: #{tpu_custom_call.1} parent=1 // pred_check
      _
    $region27: #{tpu_custom_call.1} parent=1 // pred_check_branch
      %38 = sbr.rel (0) target = $region29
    $region28: #{tpu_custom_call.1} parent=1 // pred_region
      _
    $region29: #{tpu_custom_call.1} parent=1 // pred_fallthru
      _
    // Predicated region
    $region30: #{tpu_custom_call.1} parent=1 // pred_check
      _
    $region31: #{tpu_custom_call.1} parent=1 // pred_check_branch
      %40 = sbr.rel (0) target = $region33
    $region32: #{tpu_custom_call.1} parent=1 // pred_region
      _
    $region33: #{tpu_custom_call.1} parent=1 // pred_fallthru
      _
    // Predicated region
    $region34: #{tpu_custom_call.1} parent=1 // pred_check
      _
    $region35: #{tpu_custom_call.1} parent=1 // pred_check_branch
      %42 = sbr.rel (0) target = $region37
    $region36: #{tpu_custom_call.1} parent=1 // pred_region
      _
    $region37: #{tpu_custom_call.1} parent=1 // pred_fallthru
      _
    // Predicated region
    $region38: #{tpu_custom_call.1} parent=1 // pred_check
      _
    $region39: #{tpu_custom_call.1} parent=1 // pred_check_branch
      %44 = sbr.rel (0) target = $region41
    $region40: #{tpu_custom_call.1} parent=1 // pred_region
      %46 = dma.done [#allocation3], 64
    $region41: #{tpu_custom_call.1} parent=1 // pred_fallthru
      _
    %v48 = vld [vmem:[%s1] sm:$0xf]
    %v49 = vld [vmem:[%s2] sm:$0xf]
    %v50 = vld [vmem:[%s0] sm:$0xff]
    %v51 = vld [vmem:[%s0 + $0x8] sm:$0xff]
    %54 = vst [vmem:[#allocation1] ss:$2 sm:$0xff] %v50
    %s55 = scalar_lea.vmem [#allocation1], 16
    %56 = vst [vmem:[%s55] ss:$2 sm:$0xff] %v51
    %v57 = vld.sshfl [vmem:[#allocation1] sm:$0xff pattern:$0x75316420]
    %v58 = vld.sshfl [vmem:[#allocation1 + $0x8] sm:$0xff pattern:$0x75316420]
    %v59 = vld.sshfl [vmem:[#allocation1 + $0x10] sm:$0xff pattern:$0x75316420]
    %v60 = vld.sshfl [vmem:[#allocation1 + $0x18] sm:$0xff pattern:$0x75316420]
    %65 = vrot.lane.b32.xlu0 %v57, 17
    %v66 = vpop.permute.xlu0 %65
    %67 = vrot.lane.b32.xlu0 %v58, 17
    %v68 = vpop.permute.xlu0 %67
    %69 = vrot.lane.b32.xlu0 %v59, 17
    %v70 = vpop.permute.xlu0 %69
    %71 = vrot.lane.b32.xlu0 %v60, 17
    %v72 = vpop.permute.xlu0 %71
    %v73 = vlaneseq
    %v74 = vand.u32 %v73, 127
    %vm75 = vcmp.lt.s32.totalorder %v74, 17
    %v76 = vsel %vm75, %v70, %v72
    %v77 = vsel %vm75, %v68, %v70
    %v78 = vsel %vm75, %v66, %v68
    %v79 = vsel %vm75, %v72, %v66
    %vm80 = vcmp.ge.s32.totalorder %v48, 1
    %vm81 = vcmp.ge.s32.totalorder %v49, 1
    %vm82 = vmand %vm80, %vm81
    %v83 = vsel %vm82, 1, 0
    %v84 = vperm.slane %v83, 0
    %v85 = vperm.slane %v83, 1
    %v86 = vperm.slane %v83, 2
    %v87 = vperm.slane %v83, 3
    %vm88 = vcmp.eq.s32.totalorder %v84, 1
    %vm89 = vcmp.eq.s32.totalorder %v85, 1
    %vm90 = vcmp.eq.s32.totalorder %v86, 1
    %vm91 = vcmp.eq.s32.totalorder %v87, 1
    %v92 = vsel %vm88, %v79, 0.0
    %v93 = vsel %vm89, %v78, 0.0
    %v94 = vsel %vm90, %v77, 0.0
    %v95 = vsel %vm91, %v76, 0.0
    %96 = vst [vmem:[#allocation1] ss:$2 sm:$0xff] %v50
    %s97 = scalar_lea.vmem [#allocation1], 16
    %98 = vst [vmem:[%s97] ss:$2 sm:$0xff] %v51
    %v99 = vld.sshfl [vmem:[#allocation1] sm:$0xff pattern:$0x75316420]
    %v100 = vld.sshfl [vmem:[#allocation1 + $0x8] sm:$0xff pattern:$0x75316420]
    %v101 = vld.sshfl [vmem:[#allocation1 + $0x10] sm:$0xff pattern:$0x75316420]
    %v102 = vld.sshfl [vmem:[#allocation1 + $0x18] sm:$0xff pattern:$0x75316420]
    %107 = vrot.lane.b32.xlu0 %v99, 16
    %v108 = vpop.permute.xlu0 %107
    %109 = vrot.lane.b32.xlu0 %v100, 16
    %v110 = vpop.permute.xlu0 %109
    %111 = vrot.lane.b32.xlu0 %v101, 16
    %v112 = vpop.permute.xlu0 %111
    %113 = vrot.lane.b32.xlu0 %v102, 16
    %v114 = vpop.permute.xlu0 %113
    %vm115 = vcmp.lt.s32.totalorder %v74, 16
    %v116 = vsel %vm115, %v112, %v114
    %v117 = vsel %vm115, %v110, %v112
    %v118 = vsel %vm115, %v108, %v110
    %v119 = vsel %vm115, %v114, %v108
    %v120 = vsel %vm80, 1, 0
    %v121 = vperm.slane %v120, 0
    %v122 = vperm.slane %v120, 1
    %v123 = vperm.slane %v120, 2
    %v124 = vperm.slane %v120, 3
    %vm125 = vcmp.eq.s32.totalorder %v121, 1
    %vm126 = vcmp.eq.s32.totalorder %v122, 1
    %vm127 = vcmp.eq.s32.totalorder %v123, 1
    %vm128 = vcmp.eq.s32.totalorder %v124, 1
    %v129 = vsel %vm125, %v119, 0.0
    %v130 = vsel %vm126, %v118, 0.0
    %v131 = vsel %vm127, %v117, 0.0
    %v132 = vsel %vm128, %v116, 0.0
    %133 = vst [vmem:[#allocation1] ss:$2 sm:$0xff] %v50
    %s134 = scalar_lea.vmem [#allocation1], 16
    %135 = vst [vmem:[%s134] ss:$2 sm:$0xff] %v51
    %v136 = vld.sshfl [vmem:[#allocation1] sm:$0xff pattern:$0x75316420]
    %v137 = vld.sshfl [vmem:[#allocation1 + $0x8] sm:$0xff pattern:$0x75316420]
    %v138 = vld.sshfl [vmem:[#allocation1 + $0x10] sm:$0xff pattern:$0x75316420]
    %v139 = vld.sshfl [vmem:[#allocation1 + $0x18] sm:$0xff pattern:$0x75316420]
    %144 = vrot.lane.b32.xlu0 %v136, 15
    %v145 = vpop.permute.xlu0 %144
    %146 = vrot.lane.b32.xlu0 %v137, 15
    %v147 = vpop.permute.xlu0 %146
    %148 = vrot.lane.b32.xlu0 %v138, 15
    %v149 = vpop.permute.xlu0 %148
    %150 = vrot.lane.b32.xlu0 %v139, 15
    %v151 = vpop.permute.xlu0 %150
    %vm152 = vcmp.lt.s32.totalorder %v74, 15
    %v153 = vsel %vm152, %v149, %v151
    %v154 = vsel %vm152, %v147, %v149
    %v155 = vsel %vm152, %v145, %v147
    %v156 = vsel %vm152, %v151, %v145
    %vm157 = vcmp.lt.s32.totalorder %v49, 15
    %vm158 = vmand %vm80, %vm157
    %v159 = vsel %vm158, 1, 0
    %v160 = vperm.slane %v159, 0
    %v161 = vperm.slane %v159, 1
    %v162 = vperm.slane %v159, 2
    %v163 = vperm.slane %v159, 3
    %vm164 = vcmp.eq.s32.totalorder %v160, 1
    %vm165 = vcmp.eq.s32.totalorder %v161, 1
    %vm166 = vcmp.eq.s32.totalorder %v162, 1
    %vm167 = vcmp.eq.s32.totalorder %v163, 1
    %v168 = vsel %vm164, %v156, 0.0
    %v169 = vsel %vm165, %v155, 0.0
    %v170 = vsel %vm166, %v154, 0.0
    %v171 = vsel %vm167, %v153, 0.0
    %172 = vst [vmem:[#allocation1] ss:$2 sm:$0xff] %v50
    %s173 = scalar_lea.vmem [#allocation1], 16
    %174 = vst [vmem:[%s173] ss:$2 sm:$0xff] %v51
    %v175 = vld.sshfl [vmem:[#allocation1] sm:$0xff pattern:$0x75316420]
    %v176 = vld.sshfl [vmem:[#allocation1 + $0x8] sm:$0xff pattern:$0x75316420]
    %v177 = vld.sshfl [vmem:[#allocation1 + $0x10] sm:$0xff pattern:$0x75316420]
    %v178 = vld.sshfl [vmem:[#allocation1 + $0x18] sm:$0xff pattern:$0x75316420]
    %183 = vrot.lane.b32.xlu0 %v175, 1
    %v184 = vpop.permute.xlu0 %183
    %185 = vrot.lane.b32.xlu0 %v176, 1
    %v186 = vpop.permute.xlu0 %185
    %187 = vrot.lane.b32.xlu0 %v177, 1
    %v188 = vpop.permute.xlu0 %187
    %189 = vrot.lane.b32.xlu0 %v178, 1
    %v190 = vpop.permute.xlu0 %189
    %vm191 = vcmp.lt.s32.totalorder %v74, 1
    %v192 = vsel %vm191, %v188, %v190
    %v193 = vsel %vm191, %v186, %v188
    %v194 = vsel %vm191, %v184, %v186
    %v195 = vsel %vm191, %v190, %v184
    %v196 = vsel %vm81, 1, 0
    %v197 = vperm.slane %v196, 0
    %v198 = vperm.slane %v196, 1
    %v199 = vperm.slane %v196, 2
    %v200 = vperm.slane %v196, 3
    %vm201 = vcmp.eq.s32.totalorder %v197, 1
    %vm202 = vcmp.eq.s32.totalorder %v198, 1
    %vm203 = vcmp.eq.s32.totalorder %v199, 1
    %vm204 = vcmp.eq.s32.totalorder %v200, 1
    %v205 = vsel %vm201, %v195, 0.0
    %v206 = vsel %vm202, %v194, 0.0
    %v207 = vsel %vm203, %v193, 0.0
    %v208 = vsel %vm204, %v192, 0.0
    %209 = vst [vmem:[#allocation1] ss:$2 sm:$0xff] %v50
    %s210 = scalar_lea.vmem [#allocation1], 16
    %211 = vst [vmem:[%s210] ss:$2 sm:$0xff] %v51
    %v212 = vld.sshfl [vmem:[#allocation1] sm:$0xff pattern:$0x75316420]
    %v213 = vld.sshfl [vmem:[#allocation1 + $0x8] sm:$0xff pattern:$0x75316420]
    %v214 = vld.sshfl [vmem:[#allocation1 + $0x10] sm:$0xff pattern:$0x75316420]
    %v215 = vld.sshfl [vmem:[#allocation1 + $0x18] sm:$0xff pattern:$0x75316420]
    %220 = vrot.lane.b32.xlu0 %v212, 127
    %v221 = vpop.permute.xlu0 %220
    %222 = vrot.lane.b32.xlu0 %v213, 127
    %v223 = vpop.permute.xlu0 %222
    %224 = vrot.lane.b32.xlu0 %v214, 127
    %v225 = vpop.permute.xlu0 %224
    %226 = vrot.lane.b32.xlu0 %v215, 127
    %v227 = vpop.permute.xlu0 %226
    %vm228 = vcmp.lt.s32.totalorder %v74, 127
    %v229 = vsel %vm228, %v225, %v227
    %v230 = vsel %vm228, %v223, %v225
    %v231 = vsel %vm228, %v221, %v223
    %v232 = vsel %vm228, %v227, %v221
    %v233 = vsel %vm157, 1, 0
    %v234 = vperm.slane %v233, 0
    %v235 = vperm.slane %v233, 1
    %v236 = vperm.slane %v233, 2
    %v237 = vperm.slane %v233, 3
    %vm238 = vcmp.eq.s32.totalorder %v234, 1
    %vm239 = vcmp.eq.s32.totalorder %v235, 1
    %vm240 = vcmp.eq.s32.totalorder %v236, 1
    %vm241 = vcmp.eq.s32.totalorder %v237, 1
    %v242 = vsel %vm238, %v231, 0.0
    %v243 = vsel %vm239, %v230, 0.0
    %v244 = vsel %vm240, %v229, 0.0
    %v245 = vsel %vm241, %v232, 0.0
    %246 = vst [vmem:[#allocation1] ss:$2 sm:$0xff] %v50
    %s247 = scalar_lea.vmem [#allocation1], 16
    %248 = vst [vmem:[%s247] ss:$2 sm:$0xff] %v51
    %v249 = vld.sshfl [vmem:[#allocation1] sm:$0xff pattern:$0x75316420]
    %v250 = vld.sshfl [vmem:[#allocation1 + $0x8] sm:$0xff pattern:$0x75316420]
    %v251 = vld.sshfl [vmem:[#allocation1 + $0x10] sm:$0xff pattern:$0x75316420]
    %v252 = vld.sshfl [vmem:[#allocation1 + $0x18] sm:$0xff pattern:$0x75316420]
    %257 = vrot.lane.b32.xlu0 %v249, 113
    %v258 = vpop.permute.xlu0 %257
    %259 = vrot.lane.b32.xlu0 %v250, 113
    %v260 = vpop.permute.xlu0 %259
    %261 = vrot.lane.b32.xlu0 %v251, 113
    %v262 = vpop.permute.xlu0 %261
    %263 = vrot.lane.b32.xlu0 %v252, 113
    %v264 = vpop.permute.xlu0 %263
    %vm265 = vcmp.lt.s32.totalorder %v74, 113
    %v266 = vsel %vm265, %v262, %v264
    %v267 = vsel %vm265, %v260, %v262
    %v268 = vsel %vm265, %v258, %v260
    %v269 = vsel %vm265, %v264, %v258
    %vm270 = vcmp.lt.s32.totalorder %v48, 15
    %vm271 = vmand %vm270, %vm81
    %v272 = vsel %vm271, 1, 0
    %v273 = vperm.slane %v272, 0
    %v274 = vperm.slane %v272, 1
    %v275 = vperm.slane %v272, 2
    %v276 = vperm.slane %v272, 3
    %vm277 = vcmp.eq.s32.totalorder %v273, 1
    %vm278 = vcmp.eq.s32.totalorder %v274, 1
    %vm279 = vcmp.eq.s32.totalorder %v275, 1
    %vm280 = vcmp.eq.s32.totalorder %v276, 1
    %v281 = vsel %vm277, %v268, 0.0
    %v282 = vsel %vm278, %v267, 0.0
    %v283 = vsel %vm279, %v266, 0.0
    %v284 = vsel %vm280, %v269, 0.0
    %285 = vst [vmem:[#allocation1] ss:$2 sm:$0xff] %v50
    %s286 = scalar_lea.vmem [#allocation1], 16
    %287 = vst [vmem:[%s286] ss:$2 sm:$0xff] %v51
    %v288 = vld.sshfl [vmem:[#allocation1] sm:$0xff pattern:$0x75316420]
    %v289 = vld.sshfl [vmem:[#allocation1 + $0x8] sm:$0xff pattern:$0x75316420]
    %v290 = vld.sshfl [vmem:[#allocation1 + $0x10] sm:$0xff pattern:$0x75316420]
    %v291 = vld.sshfl [vmem:[#allocation1 + $0x18] sm:$0xff pattern:$0x75316420]
    %296 = vrot.lane.b32.xlu0 %v288, 112
    %v297 = vpop.permute.xlu0 %296
    %298 = vrot.lane.b32.xlu0 %v289, 112
    %v299 = vpop.permute.xlu0 %298
    %300 = vrot.lane.b32.xlu0 %v290, 112
    %v301 = vpop.permute.xlu0 %300
    %302 = vrot.lane.b32.xlu0 %v291, 112
    %v303 = vpop.permute.xlu0 %302
    %vm304 = vcmp.lt.s32.totalorder %v74, 112
    %v305 = vsel %vm304, %v301, %v303
    %v306 = vsel %vm304, %v299, %v301
    %v307 = vsel %vm304, %v297, %v299
    %v308 = vsel %vm304, %v303, %v297
    %v309 = vsel %vm270, 1, 0
    %v310 = vperm.slane %v309, 0
    %v311 = vperm.slane %v309, 1
    %v312 = vperm.slane %v309, 2
    %v313 = vperm.slane %v309, 3
    %vm314 = vcmp.eq.s32.totalorder %v310, 1
    %vm315 = vcmp.eq.s32.totalorder %v311, 1
    %vm316 = vcmp.eq.s32.totalorder %v312, 1
    %vm317 = vcmp.eq.s32.totalorder %v313, 1
    %v318 = vsel %vm314, %v307, 0.0
    %v319 = vsel %vm315, %v306, 0.0
    %v320 = vsel %vm316, %v305, 0.0
    %v321 = vsel %vm317, %v308, 0.0
    %322 = vst [vmem:[#allocation1] ss:$2 sm:$0xff] %v50
    %s323 = scalar_lea.vmem [#allocation1], 16
    %324 = vst [vmem:[%s323] ss:$2 sm:$0xff] %v51
    %v325 = vld.sshfl [vmem:[#allocation1] sm:$0xff pattern:$0x75316420]
    %v326 = vld.sshfl [vmem:[#allocation1 + $0x8] sm:$0xff pattern:$0x75316420]
    %v327 = vld.sshfl [vmem:[#allocation1 + $0x10] sm:$0xff pattern:$0x75316420]
    %v328 = vld.sshfl [vmem:[#allocation1 + $0x18] sm:$0xff pattern:$0x75316420]
    %333 = vrot.lane.b32.xlu0 %v325, 111
    %v334 = vpop.permute.xlu0 %333
    %335 = vrot.lane.b32.xlu0 %v326, 111
    %v336 = vpop.permute.xlu0 %335
    %337 = vrot.lane.b32.xlu0 %v327, 111
    %v338 = vpop.permute.xlu0 %337
    %339 = vrot.lane.b32.xlu0 %v328, 111
    %v340 = vpop.permute.xlu0 %339
    %vm341 = vcmp.lt.s32.totalorder %v74, 111
    %v342 = vsel %vm341, %v338, %v340
    %v343 = vsel %vm341, %v336, %v338
    %v344 = vsel %vm341, %v334, %v336
    %v345 = vsel %vm341, %v340, %v334
    %vm346 = vmand %vm270, %vm157
    %v347 = vsel %vm346, 1, 0
    %v348 = vperm.slane %v347, 0
    %v349 = vperm.slane %v347, 1
    %v350 = vperm.slane %v347, 2
    %v351 = vperm.slane %v347, 3
    %vm352 = vcmp.eq.s32.totalorder %v348, 1
    %vm353 = vcmp.eq.s32.totalorder %v349, 1
    %vm354 = vcmp.eq.s32.totalorder %v350, 1
    %vm355 = vcmp.eq.s32.totalorder %v351, 1
    %v356 = vsel %vm352, %v344, 0.0
    %v357 = vsel %vm353, %v343, 0.0
    %v358 = vsel %vm354, %v342, 0.0
    %v359 = vsel %vm355, %v345, 0.0
    %v364 = vrot.slane %v129, 4
    %v365 = vrot.slane %v130, 4
    %v366 = vrot.slane %v131, 4
    %v367 = vrot.slane %v132, 4
    %v376 = vrot.slane %v205, 4
    %v377 = vrot.slane %v206, 4
    %v378 = vrot.slane %v207, 4
    %v379 = vrot.slane %v208, 4
    %384 = vst [vmem:[#allocation1] ss:$2 sm:$0xff] %v50
    %s385 = scalar_lea.vmem [#allocation1], 16
    %386 = vst [vmem:[%s385] ss:$2 sm:$0xff] %v51
    %v387 = vld.sshfl [vmem:[#allocation1] sm:$0xff pattern:$0x75316420]
    %v388 = vld.sshfl [vmem:[#allocation1 + $0x8] sm:$0xff pattern:$0x75316420]
    %v389 = vld.sshfl [vmem:[#allocation1 + $0x10] sm:$0xff pattern:$0x75316420]
    %v390 = vld.sshfl [vmem:[#allocation1 + $0x18] sm:$0xff pattern:$0x75316420]
    %v399 = vrot.slane %v242, 4
    %v400 = vrot.slane %v243, 4
    %v401 = vrot.slane %v244, 4
    %v402 = vrot.slane %v245, 4
    %v411 = vrot.slane %v318, 4
    %v412 = vrot.slane %v319, 4
    %v413 = vrot.slane %v320, 4
    %v414 = vrot.slane %v321, 4
    %vm419 = vcmask 1043456
    %v420 = vsel %vm419, %v92, %v364
    %v421 = vsel %vm419, %v93, %v365
    %v422 = vsel %vm419, %v94, %v366
    %v423 = vsel %vm419, %v95, %v367
    %v424 = vsel %vm419, %v168, %v376
    %v425 = vsel %vm419, %v169, %v377
    %v426 = vsel %vm419, %v170, %v378
    %v427 = vsel %vm419, %v171, %v379
    %v428 = vsel %vm419, %v387, %v399
    %v429 = vsel %vm419, %v388, %v400
    %v430 = vsel %vm419, %v389, %v401
    %v431 = vsel %vm419, %v390, %v402
    %v432 = vsel %vm419, %v281, %v411
    %v433 = vsel %vm419, %v282, %v412
    %v434 = vsel %vm419, %v283, %v413
    %v435 = vsel %vm419, %v284, %v414
    %v436 = vpack.c.bf16 %v424, %v420
    %v437 = vpack.c.bf16 %v425, %v421
    %v438 = vpack.c.bf16 %v426, %v422
    %v439 = vpack.c.bf16 %v427, %v423
    %v440 = vpack.c.bf16 %v432, %v428
    %v441 = vpack.c.bf16 %v433, %v429
    %v442 = vpack.c.bf16 %v434, %v430
    %v443 = vpack.c.bf16 %v435, %v431
    %v444 = vpack.c.bf16 %v356, %v356
    %v445 = vpack.c.bf16 %v357, %v357
    %v446 = vpack.c.bf16 %v358, %v358
    %v447 = vpack.c.bf16 %v359, %v359
    %v448 = vld [vmem:[%s3] sm:$0xf]
    %v449 = vld [vmem:[%s4] sm:$0xff]
    %451 = vset.pattern.permute.xlu0 0
    %452 = vperm.xlu0 %451, %v449
    %v453 = vpop.permute.xlu0 %452
    %vm455 = vcmask 293888
    %v457 = vsel %vm455, %v448, 0
    %vm459 = vcmask 1041408
    %v461 = vsel %vm459, %v444, 0
    %v464 = vsel %vm459, %v445, 0
    %v467 = vsel %vm459, %v446, 0
    %v470 = vsel %vm459, %v447, 0
    %472 = vmatpush.bf16.msra.mxu0 0
    %473 = vmatpush.bf16.msra.mxu0 0
    %474 = vmatpush.bf16.msra.mxu0 0
    %475 = vmatpush.bf16.msra.mxu0 0
    %476 = vmatpush.bf16.msra.mxu0 0
    %477 = vmatpush.bf16.msra.mxu0 %v461
    %478 = vmatpush.bf16.msra.mxu0 %v440
    %479 = vmatpush.bf16.msra.mxu0 %v436
    %480 = vmatmul.bf16.gmra.mxu0 %v457
    %v481 = vpop.f32.mrf.mxu0
    %v482 = vadd.f32 %v453, %v481
    %v483 = vpop.f32.mrf.mxu0
    %484 = vdwg.mxu0
    %485 = vmatpush.bf16.msra.mxu0 0
    %486 = vmatpush.bf16.msra.mxu0 0
    %487 = vmatpush.bf16.msra.mxu0 0
    %488 = vmatpush.bf16.msra.mxu0 0
    %489 = vmatpush.bf16.msra.mxu0 0
    %490 = vmatpush.bf16.msra.mxu0 %v464
    %491 = vmatpush.bf16.msra.mxu0 %v441
    %492 = vmatpush.bf16.msra.mxu0 %v437
    %493 = vmatmul.bf16.gmra.mxu0 %v457
    %v494 = vpop.f32.mrf.mxu0
    %v495 = vadd.f32 %v453, %v494
    %v496 = vpop.f32.mrf.mxu0
    %497 = vdwg.mxu0
    %498 = vmatpush.bf16.msra.mxu0 0
    %499 = vmatpush.bf16.msra.mxu0 0
    %500 = vmatpush.bf16.msra.mxu0 0
    %501 = vmatpush.bf16.msra.mxu0 0
    %502 = vmatpush.bf16.msra.mxu0 0
    %503 = vmatpush.bf16.msra.mxu0 %v467
    %504 = vmatpush.bf16.msra.mxu0 %v442
    %505 = vmatpush.bf16.msra.mxu0 %v438
    %506 = vmatmul.bf16.gmra.mxu0 %v457
    %v507 = vpop.f32.mrf.mxu0
    %v508 = vadd.f32 %v453, %v507
    %v509 = vpop.f32.mrf.mxu0
    %510 = vdwg.mxu0
    %511 = vmatpush.bf16.msra.mxu0 0
    %512 = vmatpush.bf16.msra.mxu0 0
    %513 = vmatpush.bf16.msra.mxu0 0
    %514 = vmatpush.bf16.msra.mxu0 0
    %515 = vmatpush.bf16.msra.mxu0 0
    %516 = vmatpush.bf16.msra.mxu0 %v470
    %517 = vmatpush.bf16.msra.mxu0 %v443
    %518 = vmatpush.bf16.msra.mxu0 %v439
    %519 = vmatmul.bf16.gmra.mxu0 %v457
    %v520 = vpop.f32.mrf.mxu0
    %v521 = vadd.f32 %v453, %v520
    %v522 = vpop.f32.mrf.mxu0
    %523 = vdwg.mxu0
    %vm524 = vcmp.ge.f32.partialorder %v482, 0.0
    %vm525 = vcmp.ge.f32.partialorder %v495, 0.0
    %vm526 = vcmp.ge.f32.partialorder %v508, 0.0
    %vm527 = vcmp.ge.f32.partialorder %v521, 0.0
    %v528 = vmul.f32 %v482, 0.2
    %v529 = vmul.f32 %v495, 0.2
    %v530 = vmul.f32 %v508, 0.2
    %v531 = vmul.f32 %v521, 0.2
    %v532 = vsel %vm524, %v482, %v528
    %v533 = vsel %vm525, %v495, %v529
    %v534 = vsel %vm526, %v508, %v530
    %v535 = vsel %vm527, %v521, %v531
    %v536 = vmul.f32 %v532, 1.4142135
    %v537 = vmul.f32 %v533, 1.4142135
    %v538 = vmul.f32 %v534, 1.4142135
    %v539 = vmul.f32 %v535, 1.4142135
    %540 = vrot.lane.b32.xlu0 %v536, 17
    %v541 = vpop.permute.xlu0 %540
    %542 = vrot.lane.b32.xlu0 %v537, 17
    %v543 = vpop.permute.xlu0 %542
    %544 = vrot.lane.b32.xlu0 %v538, 17
    %v545 = vpop.permute.xlu0 %544
    %546 = vrot.lane.b32.xlu0 %v539, 17
    %v547 = vpop.permute.xlu0 %546
    %v548 = vsel %vm75, %v545, %v547
    %v549 = vsel %vm75, %v543, %v545
    %v550 = vsel %vm75, %v541, %v543
    %v551 = vsel %vm75, %v547, %v541
    %v552 = vsel %vm88, %v551, 0.0
    %v553 = vsel %vm89, %v550, 0.0
    %v554 = vsel %vm90, %v549, 0.0
    %v555 = vsel %vm91, %v548, 0.0
    %556 = vrot.lane.b32.xlu0 %v536, 16
    %v557 = vpop.permute.xlu0 %556
    %558 = vrot.lane.b32.xlu0 %v537, 16
    %v559 = vpop.permute.xlu0 %558
    %560 = vrot.lane.b32.xlu0 %v538, 16
    %v561 = vpop.permute.xlu0 %560
    %562 = vrot.lane.b32.xlu0 %v539, 16
    %v563 = vpop.permute.xlu0 %562
    %v564 = vsel %vm115, %v561, %v563
    %v565 = vsel %vm115, %v559, %v561
    %v566 = vsel %vm115, %v557, %v559
    %v567 = vsel %vm115, %v563, %v557
    %v568 = vsel %vm125, %v567, 0.0
    %v569 = vsel %vm126, %v566, 0.0
    %v570 = vsel %vm127, %v565, 0.0
    %v571 = vsel %vm128, %v564, 0.0
    %572 = vrot.lane.b32.xlu0 %v536, 15
    %v573 = vpop.permute.xlu0 %572
    %574 = vrot.lane.b32.xlu0 %v537, 15
    %v575 = vpop.permute.xlu0 %574
    %576 = vrot.lane.b32.xlu0 %v538, 15
    %v577 = vpop.permute.xlu0 %576
    %578 = vrot.lane.b32.xlu0 %v539, 15
    %v579 = vpop.permute.xlu0 %578
    %v580 = vsel %vm152, %v577, %v579
    %v581 = vsel %vm152, %v575, %v577
    %v582 = vsel %vm152, %v573, %v575
    %v583 = vsel %vm152, %v579, %v573
    %v584 = vsel %vm164, %v583, 0.0
    %v585 = vsel %vm165, %v582, 0.0
    %v586 = vsel %vm166, %v581, 0.0
    %v587 = vsel %vm167, %v580, 0.0
    %588 = vrot.lane.b32.xlu0 %v536, 1
    %v589 = vpop.permute.xlu0 %588
    %590 = vrot.lane.b32.xlu0 %v537, 1
    %v591 = vpop.permute.xlu0 %590
    %592 = vrot.lane.b32.xlu0 %v538, 1
    %v593 = vpop.permute.xlu0 %592
    %594 = vrot.lane.b32.xlu0 %v539, 1
    %v595 = vpop.permute.xlu0 %594
    %v596 = vsel %vm191, %v593, %v595
    %v597 = vsel %vm191, %v591, %v593
    %v598 = vsel %vm191, %v589, %v591
    %v599 = vsel %vm191, %v595, %v589
    %v600 = vsel %vm201, %v599, 0.0
    %v601 = vsel %vm202, %v598, 0.0
    %v602 = vsel %vm203, %v597, 0.0
    %v603 = vsel %vm204, %v596, 0.0
    %604 = vrot.lane.b32.xlu0 %v536, 127
    %v605 = vpop.permute.xlu0 %604
    %606 = vrot.lane.b32.xlu0 %v537, 127
    %v607 = vpop.permute.xlu0 %606
    %608 = vrot.lane.b32.xlu0 %v538, 127
    %v609 = vpop.permute.xlu0 %608
    %610 = vrot.lane.b32.xlu0 %v539, 127
    %v611 = vpop.permute.xlu0 %610
    %v612 = vsel %vm228, %v609, %v611
    %v613 = vsel %vm228, %v607, %v609
    %v614 = vsel %vm228, %v605, %v607
    %v615 = vsel %vm228, %v611, %v605
    %v616 = vsel %vm238, %v614, 0.0
    %v617 = vsel %vm239, %v613, 0.0
    %v618 = vsel %vm240, %v612, 0.0
    %v619 = vsel %vm241, %v615, 0.0
    %620 = vrot.lane.b32.xlu0 %v536, 113
    %v621 = vpop.permute.xlu0 %620
    %622 = vrot.lane.b32.xlu0 %v537, 113
    %v623 = vpop.permute.xlu0 %622
    %624 = vrot.lane.b32.xlu0 %v538, 113
    %v625 = vpop.permute.xlu0 %624
    %626 = vrot.lane.b32.xlu0 %v539, 113
    %v627 = vpop.permute.xlu0 %626
    %v628 = vsel %vm265, %v625, %v627
    %v629 = vsel %vm265, %v623, %v625
    %v630 = vsel %vm265, %v621, %v623
    %v631 = vsel %vm265, %v627, %v621
    %v632 = vsel %vm277, %v630, 0.0
    %v633 = vsel %vm278, %v629, 0.0
    %v634 = vsel %vm279, %v628, 0.0
    %v635 = vsel %vm280, %v631, 0.0
    %636 = vrot.lane.b32.xlu0 %v536, 112
    %v637 = vpop.permute.xlu0 %636
    %638 = vrot.lane.b32.xlu0 %v537, 112
    %v639 = vpop.permute.xlu0 %638
    %640 = vrot.lane.b32.xlu0 %v538, 112
    %v641 = vpop.permute.xlu0 %640
    %642 = vrot.lane.b32.xlu0 %v539, 112
    %v643 = vpop.permute.xlu0 %642
    %v644 = vsel %vm304, %v641, %v643
    %v645 = vsel %vm304, %v639, %v641
    %v646 = vsel %vm304, %v637, %v639
    %v647 = vsel %vm304, %v643, %v637
    %v648 = vsel %vm314, %v646, 0.0
    %v649 = vsel %vm315, %v645, 0.0
    %v650 = vsel %vm316, %v644, 0.0
    %v651 = vsel %vm317, %v647, 0.0
    %652 = vrot.lane.b32.xlu0 %v536, 111
    %v653 = vpop.permute.xlu0 %652
    %654 = vrot.lane.b32.xlu0 %v537, 111
    %v655 = vpop.permute.xlu0 %654
    %656 = vrot.lane.b32.xlu0 %v538, 111
    %v657 = vpop.permute.xlu0 %656
    %658 = vrot.lane.b32.xlu0 %v539, 111
    %v659 = vpop.permute.xlu0 %658
    %v660 = vsel %vm341, %v657, %v659
    %v661 = vsel %vm341, %v655, %v657
    %v662 = vsel %vm341, %v653, %v655
    %v663 = vsel %vm341, %v659, %v653
    %v664 = vsel %vm352, %v662, 0.0
    %v665 = vsel %vm353, %v661, 0.0
    %v666 = vsel %vm354, %v660, 0.0
    %v667 = vsel %vm355, %v663, 0.0
    %v668 = vpack.c.bf16 %v568, %v552
    %v669 = vpack.c.bf16 %v569, %v553
    %v670 = vpack.c.bf16 %v570, %v554
    %v671 = vpack.c.bf16 %v571, %v555
    %v672 = vpack.c.bf16 %v600, %v584
    %v673 = vpack.c.bf16 %v601, %v585
    %v674 = vpack.c.bf16 %v602, %v586
    %v675 = vpack.c.bf16 %v603, %v587
    %v676 = vpack.c.bf16 %v616, %v536
    %v677 = vpack.c.bf16 %v617, %v537
    %v678 = vpack.c.bf16 %v618, %v538
    %v679 = vpack.c.bf16 %v619, %v539
    %v680 = vpack.c.bf16 %v648, %v632
    %v681 = vpack.c.bf16 %v649, %v633
    %v682 = vpack.c.bf16 %v650, %v634
    %v683 = vpack.c.bf16 %v651, %v635
    %v684 = vpack.c.bf16 %v664, %v664
    %v685 = vpack.c.bf16 %v665, %v665
    %v686 = vpack.c.bf16 %v666, %v666
    %v687 = vpack.c.bf16 %v667, %v667
    %v688 = vld [vmem:[#allocation2] sm:$0xf]
    %v689 = vld [vmem:[%s6] sm:$0xff]
    %691 = vset.pattern.permute.xlu0 0
    %692 = vperm.xlu0 %691, %v689
    %v693 = vpop.permute.xlu0 %692
    %vm695 = vcmask 588800
    %v697 = vsel %vm695, %v688, 0
    %v700 = vsel %vm419, %v684, 0
    %v703 = vsel %vm419, %v685, 0
    %v706 = vsel %vm419, %v686, 0
    %v709 = vsel %vm419, %v687, 0
    %711 = vmatpush.bf16.msra.mxu0 0
    %712 = vmatpush.bf16.msra.mxu0 0
    %713 = vmatpush.bf16.msra.mxu0 0
    %714 = vmatpush.bf16.msra.mxu0 %v700
    %715 = vmatpush.bf16.msra.mxu0 %v680
    %716 = vmatpush.bf16.msra.mxu0 %v676
    %717 = vmatpush.bf16.msra.mxu0 %v672
    %718 = vmatpush.bf16.msra.mxu0 %v668
    %719 = vmatmul.bf16.gmra.mxu0 %v697
    %v720 = vpop.f32.mrf.mxu0
    %v721 = vadd.f32 %v693, %v720
    %v722 = vpop.f32.mrf.mxu0
    %723 = vdwg.mxu0
    %724 = vmatpush.bf16.msra.mxu0 0
    %725 = vmatpush.bf16.msra.mxu0 0
    %726 = vmatpush.bf16.msra.mxu0 0
    %727 = vmatpush.bf16.msra.mxu0 %v703
    %728 = vmatpush.bf16.msra.mxu0 %v681
    %729 = vmatpush.bf16.msra.mxu0 %v677
    %730 = vmatpush.bf16.msra.mxu0 %v673
    %731 = vmatpush.bf16.msra.mxu0 %v669
    %732 = vmatmul.bf16.gmra.mxu0 %v697
    %v733 = vpop.f32.mrf.mxu0
    %v734 = vadd.f32 %v693, %v733
    %v735 = vpop.f32.mrf.mxu0
    %736 = vdwg.mxu0
    %737 = vmatpush.bf16.msra.mxu0 0
    %738 = vmatpush.bf16.msra.mxu0 0
    %739 = vmatpush.bf16.msra.mxu0 0
    %740 = vmatpush.bf16.msra.mxu0 %v706
    %741 = vmatpush.bf16.msra.mxu0 %v682
    %742 = vmatpush.bf16.msra.mxu0 %v678
    %743 = vmatpush.bf16.msra.mxu0 %v674
    %744 = vmatpush.bf16.msra.mxu0 %v670
    %745 = vmatmul.bf16.gmra.mxu0 %v697
    %v746 = vpop.f32.mrf.mxu0
    %v747 = vadd.f32 %v693, %v746
    %v748 = vpop.f32.mrf.mxu0
    %749 = vdwg.mxu0
    %750 = vmatpush.bf16.msra.mxu0 0
    %751 = vmatpush.bf16.msra.mxu0 0
    %752 = vmatpush.bf16.msra.mxu0 0
    %753 = vmatpush.bf16.msra.mxu0 %v709
    %754 = vmatpush.bf16.msra.mxu0 %v683
    %755 = vmatpush.bf16.msra.mxu0 %v679
    %756 = vmatpush.bf16.msra.mxu0 %v675
    %757 = vmatpush.bf16.msra.mxu0 %v671
    %758 = vmatmul.bf16.gmra.mxu0 %v697
    %v759 = vpop.f32.mrf.mxu0
    %v760 = vadd.f32 %v693, %v759
    %v761 = vpop.f32.mrf.mxu0
    %762 = vdwg.mxu0
    %vm763 = vcmp.ge.f32.partialorder %v721, 0.0
    %vm764 = vcmp.ge.f32.partialorder %v734, 0.0
    %vm765 = vcmp.ge.f32.partialorder %v747, 0.0
    %vm766 = vcmp.ge.f32.partialorder %v760, 0.0
    %v767 = vmul.f32 %v721, 0.2
    %v768 = vmul.f32 %v734, 0.2
    %v769 = vmul.f32 %v747, 0.2
    %v770 = vmul.f32 %v760, 0.2
    %v771 = vsel %vm763, %v721, %v767
    %v772 = vsel %vm764, %v734, %v768
    %v773 = vsel %vm765, %v747, %v769
    %v774 = vsel %vm766, %v760, %v770
    %v775 = vmul.f32 %v771, 1.4142135
    %v776 = vmul.f32 %v772, 1.4142135
    %v777 = vmul.f32 %v773, 1.4142135
    %v778 = vmul.f32 %v774, 1.4142135
    %779 = vst [vmem:[#allocation1] ss:$2 sm:$0xff] %v50
    %s780 = scalar_lea.vmem [#allocation1], 16
    %781 = vst [vmem:[%s780] ss:$2 sm:$0xff] %v51
    %v782 = vld.sshfl [vmem:[#allocation1] sm:$0xff pattern:$0x75316420]
    %v783 = vld.sshfl [vmem:[#allocation1 + $0x8] sm:$0xff pattern:$0x75316420]
    %v784 = vld.sshfl [vmem:[#allocation1 + $0x10] sm:$0xff pattern:$0x75316420]
    %v785 = vld.sshfl [vmem:[#allocation1 + $0x18] sm:$0xff pattern:$0x75316420]
    %v790 = vpack.c.bf16 %v782, %v782
    %v791 = vpack.c.bf16 %v783, %v783
    %v792 = vpack.c.bf16 %v784, %v784
    %v793 = vpack.c.bf16 %v785, %v785
    %v794 = vld [vmem:[%s7] sm:$0xf]
    %v795 = vld [vmem:[%s8] sm:$0xff]
    %797 = vset.pattern.permute.xlu0 0
    %798 = vperm.xlu0 %797, %v795
    %v799 = vpop.permute.xlu0 %798
    %vm801 = vcmask 31744
    %v803 = vsel %vm801, %v794, 0
    %v806 = vsel %vm459, %v790, 0
    %v809 = vsel %vm459, %v791, 0
    %v812 = vsel %vm459, %v792, 0
    %v815 = vsel %vm459, %v793, 0
    %817 = vmatpush.bf16.msra.mxu0 0
    %818 = vmatpush.bf16.msra.mxu0 0
    %819 = vmatpush.bf16.msra.mxu0 0
    %820 = vmatpush.bf16.msra.mxu0 0
    %821 = vmatpush.bf16.msra.mxu0 0
    %822 = vmatpush.bf16.msra.mxu0 0
    %823 = vmatpush.bf16.msra.mxu0 0
    %824 = vmatpush.bf16.msra.mxu0 %v806
    %825 = vmatmul.bf16.gmra.mxu0 %v803
    %v826 = vpop.f32.mrf.mxu0
    %v827 = vadd.f32 %v799, %v826
    %v828 = vpop.f32.mrf.mxu0
    %829 = vdwg.mxu0
    %830 = vmatpush.bf16.msra.mxu0 0
    %831 = vmatpush.bf16.msra.mxu0 0
    %832 = vmatpush.bf16.msra.mxu0 0
    %833 = vmatpush.bf16.msra.mxu0 0
    %834 = vmatpush.bf16.msra.mxu0 0
    %835 = vmatpush.bf16.msra.mxu0 0
    %836 = vmatpush.bf16.msra.mxu0 0
    %837 = vmatpush.bf16.msra.mxu0 %v809
    %838 = vmatmul.bf16.gmra.mxu0 %v803
    %v839 = vpop.f32.mrf.mxu0
    %v840 = vadd.f32 %v799, %v839
    %v841 = vpop.f32.mrf.mxu0
    %842 = vdwg.mxu0
    %843 = vmatpush.bf16.msra.mxu0 0
    %844 = vmatpush.bf16.msra.mxu0 0
    %845 = vmatpush.bf16.msra.mxu0 0
    %846 = vmatpush.bf16.msra.mxu0 0
    %847 = vmatpush.bf16.msra.mxu0 0
    %848 = vmatpush.bf16.msra.mxu0 0
    %849 = vmatpush.bf16.msra.mxu0 0
    %850 = vmatpush.bf16.msra.mxu0 %v812
    %851 = vmatmul.bf16.gmra.mxu0 %v803
    %v852 = vpop.f32.mrf.mxu0
    %v853 = vadd.f32 %v799, %v852
    %v854 = vpop.f32.mrf.mxu0
    %855 = vdwg.mxu0
    %856 = vmatpush.bf16.msra.mxu0 0
    %857 = vmatpush.bf16.msra.mxu0 0
    %858 = vmatpush.bf16.msra.mxu0 0
    %859 = vmatpush.bf16.msra.mxu0 0
    %860 = vmatpush.bf16.msra.mxu0 0
    %861 = vmatpush.bf16.msra.mxu0 0
    %862 = vmatpush.bf16.msra.mxu0 0
    %863 = vmatpush.bf16.msra.mxu0 %v815
    %864 = vmatmul.bf16.gmra.mxu0 %v803
    %v865 = vpop.f32.mrf.mxu0
    %v866 = vadd.f32 %v799, %v865
    %v867 = vpop.f32.mrf.mxu0
    %868 = vdwg.mxu0
    %vm869 = vcmp.ge.f32.partialorder %v827, 0.0
    %vm870 = vcmp.ge.f32.partialorder %v840, 0.0
    %vm871 = vcmp.ge.f32.partialorder %v853, 0.0
    %vm872 = vcmp.ge.f32.partialorder %v866, 0.0
    %v873 = vmul.f32 %v827, 0.2
    %v874 = vmul.f32 %v840, 0.2
    %v875 = vmul.f32 %v853, 0.2
    %v876 = vmul.f32 %v866, 0.2
    %v877 = vsel %vm869, %v827, %v873
    %v878 = vsel %vm870, %v840, %v874
    %v879 = vsel %vm871, %v853, %v875
    %v880 = vsel %vm872, %v866, %v876
    %v881 = vmul.f32 %v877, 1.4142135
    %v882 = vmul.f32 %v878, 1.4142135
    %v883 = vmul.f32 %v879, 1.4142135
    %v884 = vmul.f32 %v880, 1.4142135
    %v885 = vadd.f32 %v775, %v881
    %v886 = vadd.f32 %v776, %v882
    %v887 = vadd.f32 %v777, %v883
    %v888 = vadd.f32 %v778, %v884
    %v889 = vmul.f32 %v885, 0.70710677
    %v890 = vmul.f32 %v886, 0.70710677
    %v891 = vmul.f32 %v887, 0.70710677
    %v892 = vmul.f32 %v888, 0.70710677
    %893 = vst [vmem:[#allocation5] sm:$0xff] %v889
    %894 = vst [vmem:[#allocation5 + $0x8] sm:$0xff] %v890
    %895 = vst [vmem:[#allocation5 + $0x10] sm:$0xff] %v891
    %896 = vst [vmem:[#allocation5 + $0x18] sm:$0xff] %v892
    // Predicated region
    $region42: #{tpu_custom_call.1} parent=1 // pred_check
      _
    $region43: #{tpu_custom_call.1} parent=1 // pred_check_branch
      %898 = sbr.rel (0) target = $region45
    $region44: #{tpu_custom_call.1} parent=1 // pred_region
      %900 = vsyncadd [#allocation4], 0
      %s902 = sshll.u32 [#allocation5], 4
      %s903 = int_to_ptr.vmem [resolvable:$true] %s902
      %s904 = sshll.u32 %s9, 4
      %s905 = int_to_ptr.hbm [resolvable:$true] %s904
      %907 = dma.vmem_to_hbm [thread:$0]  %s903, 512, %s905, [#allocation4]
    $region45: #{tpu_custom_call.1} parent=1 // pred_fallthru
      _
    // Predicated region
    $region46: #{tpu_custom_call.1} parent=1 // pred_check
      _
    $region47: #{tpu_custom_call.1} parent=1 // pred_check_branch
      %909 = sbr.rel (0) target = $region49
    $region48: #{tpu_custom_call.1} parent=1 // pred_region
      %911 = dma.done [#allocation4], 512
    $region49: #{tpu_custom_call.1} parent=1 // pred_fallthru
      _
    %912 = vsyncpa [#allocation3], 1
    %913 = vsyncpa [#allocation4], 1

</llo_original>
